<compile_context>
chip_gen: v5e
topology: v5e:2x2
jax: 0.10.0
libtpu: 0.0.40
codegen_flags: <defaults>
</compile_context>

<pallas_src>
import jax
import jax.numpy as jnp
from jax.experimental import pallas as pl
from jax.experimental.pallas import tpu as pltpu

LANE = 128


def _mlp_kernel(x_ref, w1_ref, b1_ref, w2_ref, b2_ref, w3c_ref, b3_ref, o_ref):
    x_row = x_ref[...]                                             # (1, TB)
    # fc1 (in_features == 1): VPU broadcast multiply, no MXU round-trip.
    h1 = jnp.maximum(w1_ref[...] * x_row + b1_ref[...], 0.0)      # (64, TB)
    # fc2: the only genuine contraction -> MXU, explicit f32 accumulation.
    h2 = jnp.dot(w2_ref[...], h1, preferred_element_type=jnp.float32)
    h2 = jnp.maximum(h2 + b2_ref[...], 0.0)                       # (64, TB)
    # fc3 (out_features == 1): VPU lane-broadcast multiply + XLU sublane-sum
    # instead of a second MXU matmul (avoids the MXU drain between fc2/fc3).
    out = jnp.sum(w3c_ref[...] * h2, axis=0, keepdims=True)       # (1, TB)
    o_ref[...] = (out + b3_ref[0, 0]).astype(o_ref.dtype)         # (1, TB)


def _round_up(n, m):
    return (n + m - 1) // m * m


def _cdiv(n, m):
    return (n + m - 1) // m


def stock_price_predictor(x, params, *, tile_b=8192):
    """x: (B, 1) float32. params: PyTorch-layout weights (see init_params)."""
    B, F = x.shape
    assert F == 1
    w1, b1 = params["w1"], params["b1"]   # (64, 1), (64, 1)
    w2, b2 = params["w2"], params["b2"]   # (64, 64), (64, 1)
    w3, b3 = params["w3"], params["b3"]   # (1, 64), (1, 1)
    w3c = w3.reshape(64, 1)               # column layout for the VPU/XLU fc3

    # Batch lives on the 128-wide lane axis.  Pick the tile so that
    #   * per-step overhead is amortized (big tiles, default 8192 lanes),
    #   * the grid has >=2 steps whenever the batch spans >128 lanes, so both
    #     v7x TensorCores participate via the "parallel" grid axis,
    #   * VMEM stays comfortable (tile capped at tile_b, 32 MiB scoped limit).
    tile_b = max(LANE, _round_up(tile_b, LANE))
    b_pad = _round_up(B, LANE)
    if b_pad <= LANE:
        tb = LANE
    else:
        tb = min(tile_b, _round_up(_cdiv(b_pad, 2), LANE))
    grid = (_cdiv(B, tb),)

    # No host-side padding: the last block's OOB lanes are read as garbage but
    # never cross lanes (fc2/fc3 contract over sublanes only) and their stores
    # are masked at the (1, B) output boundary.
    x_t = x.reshape(1, B)

    def rep(shape):
        return pl.BlockSpec(shape, lambda i: (0,) * len(shape))

    flops = 2 * B * (1 * 64 + 64 * 64 + 64 * 1)
    bytes_accessed = 4 * (2 * B + 64 + 64 + 64 * 64 + 64 + 64 + 1)

    out_t = pl.pallas_call(
        _mlp_kernel,
        out_shape=jax.ShapeDtypeStruct((1, B), x.dtype),
        grid_spec=pltpu.PrefetchScalarGridSpec(
            num_scalar_prefetch=0,
            grid=grid,
            in_specs=[
                pl.BlockSpec((1, tb), lambda i: (0, i)),             # x tiles
                rep(w1.shape), rep(b1.shape),                        # fc1
                rep(w2.shape), rep(b2.shape),                        # fc2
                rep(w3c.shape),                                      # fc3 weight
                pl.BlockSpec(memory_space=pltpu.MemorySpace.SMEM),   # fc3 bias
            ],
            out_specs=pl.BlockSpec((1, tb), lambda i: (0, i)),
        ),
        compiler_params=pltpu.CompilerParams(
            dimension_semantics=("parallel",),
            vmem_limit_bytes=32 * 1024 * 1024,
        ),
        cost_estimate=pl.CostEstimate(
            flops=flops, transcendentals=0, bytes_accessed=bytes_accessed),
    )(x_t, w1, b1, w2, b2, w3c, b3)

    return out_t.reshape(B, 1)


def init_params(key):
    """Deterministic init matching nn.Linear (out_features, in_features) shapes."""
    k1, k2, k3, k4, k5, k6 = jax.random.split(key, 6)

    def uniform(k, shape, fan_in):
        bound = 1.0 / jnp.sqrt(float(fan_in))
        return jax.random.uniform(k, shape, jnp.float32, -bound, bound)

    return {
        "w1": uniform(k1, (64, 1), 1),    "b1": uniform(k2, (64, 1), 1),
        "w2": uniform(k3, (64, 64), 64),  "b2": uniform(k4, (64, 1), 64),
        "w3": uniform(k5, (1, 64), 64),   "b3": uniform(k6, (1, 1), 64),
    }


def reference_forward(x, p):
    h1 = jnp.maximum(x @ p["w1"].T + p["b1"].T, 0.0)
    h2 = jnp.maximum(h1 @ p["w2"].T + p["b2"].T, 0.0)
    return h2 @ p["w3"].T + p["b3"].T


if __name__ == "__main__":
    key = jax.random.PRNGKey(0)
    kx, kp = jax.random.split(key)
    params = init_params(kp)

    # Small batch: single 128-lane block, partially filled (masked store path).
    x_small = jax.random.normal(jax.random.fold_in(kx, 0), (8, 1), jnp.float32)
    out_small = jax.block_until_ready(stock_price_predictor(x_small, params))
    ref_small = reference_forward(x_small, params)
    assert out_small.shape == (8, 1)
    assert jnp.allclose(out_small, ref_small, atol=1e-5, rtol=1e-5), "mismatch (small)"

    # Ragged batch, default tiling: >=2 grid steps, last block overruns B.
    x_big = jax.random.normal(jax.random.fold_in(kx, 1), (300, 1), jnp.float32)
    out_big = jax.block_until_ready(stock_price_predictor(x_big, params))
    ref_big = reference_forward(x_big, params)
    assert out_big.shape == (300, 1)
    assert jnp.allclose(out_big, ref_big, atol=1e-5, rtol=1e-5), "mismatch (big)"

    # Same ragged batch with a forced small tile: 3-step grid path.
    out_big_t = jax.block_until_ready(
        stock_price_predictor(x_big, params, tile_b=128))
    assert jnp.allclose(out_big_t, ref_big, atol=1e-5, rtol=1e-5), "mismatch (tiled)"

    print("KERNEL_OK")
</pallas_src>

<mosaic_0001>
module attributes {stable_mosaic.version = 11 : i64} {
  func.func @_mlp_kernel(%arg0: i32, %arg1: memref<1x128xf32, #tpu.memory_space<vmem>>, %arg2: memref<64x1xf32, #tpu.memory_space<vmem>>, %arg3: memref<64x1xf32, #tpu.memory_space<vmem>>, %arg4: memref<64x64xf32, #tpu.memory_space<vmem>>, %arg5: memref<64x1xf32, #tpu.memory_space<vmem>>, %arg6: memref<64x1xf32, #tpu.memory_space<vmem>>, %arg7: memref<1x1xf32, #tpu.memory_space<smem>>, %arg8: memref<1x128xf32, #tpu.memory_space<vmem>>) attributes {dimension_semantics = [#tpu.dimension_semantics<parallel>], iteration_bounds = array<i64: 1>, scalar_prefetch = 0 : i64, scratch_operands = 0 : i64, tpu.core_type = #tpu.core_type<tc>, window_params = [{transform_indices = @transform_0, window_bounds = array<i64: 1, 128>}, {pipeline_mode = #tpu.pipeline_mode<synchronous>, transform_indices = @transform_1, window_bounds = array<i64: 64, 1>}, {pipeline_mode = #tpu.pipeline_mode<synchronous>, transform_indices = @transform_2, window_bounds = array<i64: 64, 1>}, {pipeline_mode = #tpu.pipeline_mode<synchronous>, transform_indices = @transform_3, window_bounds = array<i64: 64, 64>}, {pipeline_mode = #tpu.pipeline_mode<synchronous>, transform_indices = @transform_4, window_bounds = array<i64: 64, 1>}, {pipeline_mode = #tpu.pipeline_mode<synchronous>, transform_indices = @transform_5, window_bounds = array<i64: 64, 1>}, {transform_indices = @transform_6, window_bounds = array<i64: 1, 1>}, {transform_indices = @transform_7, window_bounds = array<i64: 1, 128>}]} {
    %c0 = arith.constant 0 : index
    %c0_0 = arith.constant 0 : index
    %0 = vector.load %arg1[%c0, %c0_0] : memref<1x128xf32, #tpu.memory_space<vmem>>, vector<1x128xf32>
    %c0_1 = arith.constant 0 : index
    %c0_2 = arith.constant 0 : index
    %1 = vector.load %arg2[%c0_1, %c0_2] : memref<64x1xf32, #tpu.memory_space<vmem>>, vector<64x1xf32>
    %2 = vector.broadcast %1 : vector<64x1xf32> to vector<64x128xf32>
    %3 = vector.broadcast %0 : vector<1x128xf32> to vector<64x128xf32>
    %4 = arith.mulf %2, %3 : vector<64x128xf32>
    %c0_3 = arith.constant 0 : index
    %c0_4 = arith.constant 0 : index
    %5 = vector.load %arg3[%c0_3, %c0_4] : memref<64x1xf32, #tpu.memory_space<vmem>>, vector<64x1xf32>
    %6 = vector.broadcast %5 : vector<64x1xf32> to vector<64x128xf32>
    %7 = arith.addf %4, %6 : vector<64x128xf32>
    %cst = arith.constant 0.000000e+00 : f32
    %8 = vector.broadcast %cst : f32 to vector<64x128xf32>
    %9 = arith.maximumf %7, %8 : vector<64x128xf32>
    %c0_5 = arith.constant 0 : index
    %c0_6 = arith.constant 0 : index
    %10 = vector.load %arg4[%c0_5, %c0_6] : memref<64x64xf32, #tpu.memory_space<vmem>>, vector<64x64xf32>
    %cst_7 = arith.constant dense<0.000000e+00> : vector<64x128xf32>
    %11 = tpu.matmul %10, %9, %cst_7 {dimension_numbers = #tpu.dot_dimension_numbers<[1], [0], [0], [1], [0, 0, 1, 1], [], []>} : vector<64x64xf32>, vector<64x128xf32>, vector<64x128xf32> -> vector<64x128xf32>
    %c0_8 = arith.constant 0 : index
    %c0_9 = arith.constant 0 : index
    %12 = vector.load %arg5[%c0_8, %c0_9] : memref<64x1xf32, #tpu.memory_space<vmem>>, vector<64x1xf32>
    %13 = vector.broadcast %12 : vector<64x1xf32> to vector<64x128xf32>
    %14 = arith.addf %11, %13 : vector<64x128xf32>
    %cst_10 = arith.constant 0.000000e+00 : f32
    %15 = vector.broadcast %cst_10 : f32 to vector<64x128xf32>
    %16 = arith.maximumf %14, %15 : vector<64x128xf32>
    %c0_11 = arith.constant 0 : index
    %c0_12 = arith.constant 0 : index
    %17 = vector.load %arg6[%c0_11, %c0_12] : memref<64x1xf32, #tpu.memory_space<vmem>>, vector<64x1xf32>
    %18 = vector.broadcast %17 : vector<64x1xf32> to vector<64x128xf32>
    %19 = arith.mulf %18, %16 : vector<64x128xf32>
    %cst_13 = arith.constant dense<0.000000e+00> : vector<128xf32>
    %20 = vector.multi_reduction <add>, %19, %cst_13 [0] : vector<64x128xf32> to vector<128xf32>
    %21 = vector.shape_cast %20 : vector<128xf32> to vector<1x128xf32>
    %c0_14 = arith.constant 0 : index
    %c0_15 = arith.constant 0 : index
    %22 = memref.load %arg7[%c0_14, %c0_15] : memref<1x1xf32, #tpu.memory_space<smem>>
    %23 = vector.broadcast %22 : f32 to vector<1x128xf32>
    %24 = arith.addf %21, %23 : vector<1x128xf32>
    %c0_16 = arith.constant 0 : index
    %c0_17 = arith.constant 0 : index
    %25 = vector.load %arg8[%c0_16, %c0_17] : memref<1x128xf32, #tpu.memory_space<vmem>>, vector<1x128xf32>
    tpu.vector_store %arg8[%c0_16, %c0_17], %24 {strides = array<i32>} : memref<1x128xf32, #tpu.memory_space<vmem>>, vector<1x128xf32>,
    return
  }
  func.func @transform_0(%arg0: i32) -> (i32, i32) {
    %c0_i32 = arith.constant 0 : i32
    %c0_i32_0 = arith.constant 0 : i32
    return %c0_i32, %arg0 : i32, i32
  }
  func.func @transform_1(%arg0: i32) -> (i32, i32) {
    %c0_i32 = arith.constant 0 : i32
    %c0_i32_0 = arith.constant 0 : i32
    %c0_i32_1 = arith.constant 0 : i32
    return %c0_i32, %c0_i32_0 : i32, i32
  }
  func.func @transform_2(%arg0: i32) -> (i32, i32) {
    %c0_i32 = arith.constant 0 : i32
    %c0_i32_0 = arith.constant 0 : i32
    %c0_i32_1 = arith.constant 0 : i32
    return %c0_i32, %c0_i32_0 : i32, i32
  }
  func.func @transform_3(%arg0: i32) -> (i32, i32) {
    %c0_i32 = arith.constant 0 : i32
    %c0_i32_0 = arith.constant 0 : i32
    %c0_i32_1 = arith.constant 0 : i32
    return %c0_i32, %c0_i32_0 : i32, i32
  }
  func.func @transform_4(%arg0: i32) -> (i32, i32) {
    %c0_i32 = arith.constant 0 : i32
    %c0_i32_0 = arith.constant 0 : i32
    %c0_i32_1 = arith.constant 0 : i32
    return %c0_i32, %c0_i32_0 : i32, i32
  }
  func.func @transform_5(%arg0: i32) -> (i32, i32) {
    %c0_i32 = arith.constant 0 : i32
    %c0_i32_0 = arith.constant 0 : i32
    %c0_i32_1 = arith.constant 0 : i32
    return %c0_i32, %c0_i32_0 : i32, i32
  }
  func.func @transform_6(%arg0: i32) -> (i32, i32) {
    %c0_i32 = arith.constant 0 : i32
    %c0_i32_0 = arith.constant 0 : i32
    %c0_i32_1 = arith.constant 0 : i32
    return %c0_i32, %c0_i32_0 : i32, i32
  }
  func.func @transform_7(%arg0: i32) -> (i32, i32) {
    %c0_i32 = arith.constant 0 : i32
    %c0_i32_0 = arith.constant 0 : i32
    return %c0_i32, %arg0 : i32, i32
  }
}

</mosaic_0001>

<llo_original>
// kernel: tpu_custom_call.1
$region0: #{tpu_custom_call.1}
  #allocation0 [shape = 'u32[]', space=smem, size = 0x4, offset = 0x4, fixed_abs, tag = 'smem constant byte address 0x4 - core index']
  #allocation1 [shape = 'u32[72,128]{1,0:T(1,128)}', space=vmem, size = 0x9000, scoped, tag = 'internal scratch']
  #allocation2 [shape = 'f32[1,1]{1,0:T(1,128)S(6)}', space=smem, size = 0x200, scoped, tag = 'scoped memory for tpu_custom_call.1']
  %s0 = inlined_call_operand.vmem [shape: f32[1,8], index: 0, kind: input, shape index: {}]
  %s1 = inlined_call_operand.vmem [shape: f32[64,1], index: 1, kind: input, shape index: {}]
  %s2 = inlined_call_operand.vmem [shape: f32[64,1], index: 2, kind: input, shape index: {}]
  %s3 = inlined_call_operand.vmem [shape: f32[64,64], index: 3, kind: input, shape index: {}]
  %s4 = inlined_call_operand.vmem [shape: f32[64,1], index: 4, kind: input, shape index: {}]
  %s5 = inlined_call_operand.vmem [shape: f32[64,1], index: 5, kind: input, shape index: {}]
  %s6 = inlined_call_operand.<no memory space> [shape: f32[1,1], index: 6, kind: input, shape index: {}]
  %s7 = inlined_call_operand.hbm [shape: f32[1,8], index: 7, kind: output, shape index: {}]
  %s8 = sld [smem:[#allocation0]]
  $region38: #{tpu_custom_call.1} parent=0
    _
  %s10 = ssub.s32 1, %s8
  %s11 = scalar_select 0, %s10, %s8
  %12 = sst [smem:[#allocation2]] %s6
  $region1: #{tpu_custom_call.1} parent=0
    #allocation3 [shape = 'u8[512]{0}', space=vmem, size = 0x400, scoped, tag = 'output window, operand 0, single buffered']
    #allocation4 [shape = 's32[1]{0}', space=sflag, size = 0x4, scoped, tag = 'scoped memory for tpu_custom_call.1']
    %13 = vsyncpa [#allocation4], 0
    // Predicated region
    $region2: #{tpu_custom_call.1} parent=1 // pred_check
      _
    $region3: #{tpu_custom_call.1} parent=1 // pred_check_branch
      %15 = sbr.rel (0) target = $region5
    $region4: #{tpu_custom_call.1} parent=1 // pred_region
      _
    $region5: #{tpu_custom_call.1} parent=1 // pred_fallthru
      _
    // Predicated region
    $region6: #{tpu_custom_call.1} parent=1 // pred_check
      _
    $region7: #{tpu_custom_call.1} parent=1 // pred_check_branch
      %17 = sbr.rel (0) target = $region9
    $region8: #{tpu_custom_call.1} parent=1 // pred_region
      _
    $region9: #{tpu_custom_call.1} parent=1 // pred_fallthru
      _
    // Predicated region
    $region10: #{tpu_custom_call.1} parent=1 // pred_check
      _
    $region11: #{tpu_custom_call.1} parent=1 // pred_check_branch
      %19 = sbr.rel (0) target = $region13
    $region12: #{tpu_custom_call.1} parent=1 // pred_region
      _
    $region13: #{tpu_custom_call.1} parent=1 // pred_fallthru
      _
    // Predicated region
    $region14: #{tpu_custom_call.1} parent=1 // pred_check
      _
    $region15: #{tpu_custom_call.1} parent=1 // pred_check_branch
      %21 = sbr.rel (0) target = $region17
    $region16: #{tpu_custom_call.1} parent=1 // pred_region
      _
    $region17: #{tpu_custom_call.1} parent=1 // pred_fallthru
      _
    // Predicated region
    $region18: #{tpu_custom_call.1} parent=1 // pred_check
      _
    $region19: #{tpu_custom_call.1} parent=1 // pred_check_branch
      %23 = sbr.rel (0) target = $region21
    $region20: #{tpu_custom_call.1} parent=1 // pred_region
      _
    $region21: #{tpu_custom_call.1} parent=1 // pred_fallthru
      _
    // Predicated region
    $region22: #{tpu_custom_call.1} parent=1 // pred_check
      _
    $region23: #{tpu_custom_call.1} parent=1 // pred_check_branch
      %25 = sbr.rel (0) target = $region25
    $region24: #{tpu_custom_call.1} parent=1 // pred_region
      _
    $region25: #{tpu_custom_call.1} parent=1 // pred_fallthru
      _
    // Predicated region
    $region26: #{tpu_custom_call.1} parent=1 // pred_check
      _
    $region27: #{tpu_custom_call.1} parent=1 // pred_check_branch
      %27 = sbr.rel (0) target = $region29
    $region28: #{tpu_custom_call.1} parent=1 // pred_region
      _
    $region29: #{tpu_custom_call.1} parent=1 // pred_fallthru
      _
    %v28 = vld [vmem:[%s0] sm:$0x1]
    %v29 = vld [vmem:[%s1] sm:$0xff]
    %v30 = vld [vmem:[%s1 + $0x8] sm:$0xff]
    %v31 = vld [vmem:[%s1 + $0x10] sm:$0xff]
    %v32 = vld [vmem:[%s1 + $0x18] sm:$0xff]
    %v33 = vld [vmem:[%s1 + $0x20] sm:$0xff]
    %v34 = vld [vmem:[%s1 + $0x28] sm:$0xff]
    %v35 = vld [vmem:[%s1 + $0x30] sm:$0xff]
    %v36 = vld [vmem:[%s1 + $0x38] sm:$0xff]
    %38 = vset.pattern.permute.xlu0 0
    %39 = vperm.xlu0 %38, %v29
    %v40 = vpop.permute.xlu0 %39
    %43 = vset.pattern.permute.xlu0 0
    %44 = vperm.xlu0 %43, %v30
    %v45 = vpop.permute.xlu0 %44
    %48 = vset.pattern.permute.xlu0 0
    %49 = vperm.xlu0 %48, %v31
    %v50 = vpop.permute.xlu0 %49
    %53 = vset.pattern.permute.xlu0 0
    %54 = vperm.xlu0 %53, %v32
    %v55 = vpop.permute.xlu0 %54
    %58 = vset.pattern.permute.xlu0 0
    %59 = vperm.xlu0 %58, %v33
    %v60 = vpop.permute.xlu0 %59
    %63 = vset.pattern.permute.xlu0 0
    %64 = vperm.xlu0 %63, %v34
    %v65 = vpop.permute.xlu0 %64
    %68 = vset.pattern.permute.xlu0 0
    %69 = vperm.xlu0 %68, %v35
    %v70 = vpop.permute.xlu0 %69
    %73 = vset.pattern.permute.xlu0 0
    %74 = vperm.xlu0 %73, %v36
    %v75 = vpop.permute.xlu0 %74
    %v78 = vperm.slane %v28, 0
    %v80 = vmul.f32 %v40, %v78
    %v81 = vmul.f32 %v45, %v78
    %v82 = vmul.f32 %v50, %v78
    %v83 = vmul.f32 %v55, %v78
    %v84 = vmul.f32 %v60, %v78
    %v85 = vmul.f32 %v65, %v78
    %v86 = vmul.f32 %v70, %v78
    %v87 = vmul.f32 %v75, %v78
    %v88 = vld [vmem:[%s2] sm:$0xff]
    %v89 = vld [vmem:[%s2 + $0x8] sm:$0xff]
    %v90 = vld [vmem:[%s2 + $0x10] sm:$0xff]
    %v91 = vld [vmem:[%s2 + $0x18] sm:$0xff]
    %v92 = vld [vmem:[%s2 + $0x20] sm:$0xff]
    %v93 = vld [vmem:[%s2 + $0x28] sm:$0xff]
    %v94 = vld [vmem:[%s2 + $0x30] sm:$0xff]
    %v95 = vld [vmem:[%s2 + $0x38] sm:$0xff]
    %97 = vset.pattern.permute.xlu0 0
    %98 = vperm.xlu0 %97, %v88
    %v99 = vpop.permute.xlu0 %98
    %102 = vset.pattern.permute.xlu0 0
    %103 = vperm.xlu0 %102, %v89
    %v104 = vpop.permute.xlu0 %103
    %107 = vset.pattern.permute.xlu0 0
    %108 = vperm.xlu0 %107, %v90
    %v109 = vpop.permute.xlu0 %108
    %112 = vset.pattern.permute.xlu0 0
    %113 = vperm.xlu0 %112, %v91
    %v114 = vpop.permute.xlu0 %113
    %117 = vset.pattern.permute.xlu0 0
    %118 = vperm.xlu0 %117, %v92
    %v119 = vpop.permute.xlu0 %118
    %122 = vset.pattern.permute.xlu0 0
    %123 = vperm.xlu0 %122, %v93
    %v124 = vpop.permute.xlu0 %123
    %127 = vset.pattern.permute.xlu0 0
    %128 = vperm.xlu0 %127, %v94
    %v129 = vpop.permute.xlu0 %128
    %132 = vset.pattern.permute.xlu0 0
    %133 = vperm.xlu0 %132, %v95
    %v134 = vpop.permute.xlu0 %133
    %v136 = vadd.f32 %v80, %v99
    %v137 = vadd.f32 %v81, %v104
    %v138 = vadd.f32 %v82, %v109
    %v139 = vadd.f32 %v83, %v114
    %v140 = vadd.f32 %v84, %v119
    %v141 = vadd.f32 %v85, %v124
    %v142 = vadd.f32 %v86, %v129
    %v143 = vadd.f32 %v87, %v134
    %v144 = vmax.f32 %v136, 0.0
    %v145 = vmax.f32 %v137, 0.0
    %v146 = vmax.f32 %v138, 0.0
    %v147 = vmax.f32 %v139, 0.0
    %v148 = vmax.f32 %v140, 0.0
    %v149 = vmax.f32 %v141, 0.0
    %v150 = vmax.f32 %v142, 0.0
    %v151 = vmax.f32 %v143, 0.0
    %v152 = vld [vmem:[%s3] sm:$0xff]
    %v153 = vld [vmem:[%s3 + $0x8] sm:$0xff]
    %v154 = vld [vmem:[%s3 + $0x10] sm:$0xff]
    %v155 = vld [vmem:[%s3 + $0x18] sm:$0xff]
    %v156 = vld [vmem:[%s3 + $0x20] sm:$0xff]
    %v157 = vld [vmem:[%s3 + $0x28] sm:$0xff]
    %v158 = vld [vmem:[%s3 + $0x30] sm:$0xff]
    %v159 = vld [vmem:[%s3 + $0x38] sm:$0xff]
    %v160 = vld [vmem:[%s4] sm:$0xff]
    %v161 = vld [vmem:[%s4 + $0x8] sm:$0xff]
    %v162 = vld [vmem:[%s4 + $0x10] sm:$0xff]
    %v163 = vld [vmem:[%s4 + $0x18] sm:$0xff]
    %v164 = vld [vmem:[%s4 + $0x20] sm:$0xff]
    %v165 = vld [vmem:[%s4 + $0x28] sm:$0xff]
    %v166 = vld [vmem:[%s4 + $0x30] sm:$0xff]
    %v167 = vld [vmem:[%s4 + $0x38] sm:$0xff]
    %169 = vset.pattern.permute.xlu0 0
    %170 = vperm.xlu0 %169, %v160
    %v171 = vpop.permute.xlu0 %170
    %174 = vset.pattern.permute.xlu0 0
    %175 = vperm.xlu0 %174, %v161
    %v176 = vpop.permute.xlu0 %175
    %179 = vset.pattern.permute.xlu0 0
    %180 = vperm.xlu0 %179, %v162
    %v181 = vpop.permute.xlu0 %180
    %184 = vset.pattern.permute.xlu0 0
    %185 = vperm.xlu0 %184, %v163
    %v186 = vpop.permute.xlu0 %185
    %189 = vset.pattern.permute.xlu0 0
    %190 = vperm.xlu0 %189, %v164
    %v191 = vpop.permute.xlu0 %190
    %194 = vset.pattern.permute.xlu0 0
    %195 = vperm.xlu0 %194, %v165
    %v196 = vpop.permute.xlu0 %195
    %199 = vset.pattern.permute.xlu0 0
    %200 = vperm.xlu0 %199, %v166
    %v201 = vpop.permute.xlu0 %200
    %204 = vset.pattern.permute.xlu0 0
    %205 = vperm.xlu0 %204, %v167
    %v206 = vpop.permute.xlu0 %205
    %vm208 = vcmask 523264
    %v210 = vsel %vm208, %v152, 0
    %v213 = vsel %vm208, %v153, 0
    %v216 = vsel %vm208, %v154, 0
    %v219 = vsel %vm208, %v155, 0
    %v222 = vsel %vm208, %v156, 0
    %v225 = vsel %vm208, %v157, 0
    %v228 = vsel %vm208, %v158, 0
    %v231 = vsel %vm208, %v159, 0
    %233 = vmatpush.msra.mxu0 0.0
    %234 = vmatpush.msra.mxu0 0.0
    %235 = vmatpush.msra.mxu0 0.0
    %236 = vmatpush.msra.mxu0 0.0
    %237 = vmatpush.msra.mxu0 0.0
    %238 = vmatpush.msra.mxu0 0.0
    %239 = vmatpush.msra.mxu0 0.0
    %240 = vmatpush.msra.mxu0 0.0
    %241 = vmatpush.msra.mxu0 %v151
    %242 = vmatpush.msra.mxu0 %v150
    %243 = vmatpush.msra.mxu0 %v149
    %244 = vmatpush.msra.mxu0 %v148
    %245 = vmatpush.msra.mxu0 %v147
    %246 = vmatpush.msra.mxu0 %v146
    %247 = vmatpush.msra.mxu0 %v145
    %248 = vmatpush.msra.mxu0 %v144
    %249 = vmatmul.f32.gmra.mxu0 %v210
    %v250 = vpop.f32.mrf.mxu0
    %v251 = vadd.f32 %v171, %v250
    %252 = vmatmul.f32.gmra.mxu0 %v213
    %v253 = vpop.f32.mrf.mxu0
    %v254 = vadd.f32 %v176, %v253
    %255 = vmatmul.f32.gmra.mxu0 %v216
    %v256 = vpop.f32.mrf.mxu0
    %v257 = vadd.f32 %v181, %v256
    %258 = vmatmul.f32.gmra.mxu0 %v219
    %v259 = vpop.f32.mrf.mxu0
    %v260 = vadd.f32 %v186, %v259
    %261 = vmatmul.f32.gmra.mxu0 %v222
    %v262 = vpop.f32.mrf.mxu0
    %v263 = vadd.f32 %v191, %v262
    %264 = vmatmul.f32.gmra.mxu0 %v225
    %v265 = vpop.f32.mrf.mxu0
    %v266 = vadd.f32 %v196, %v265
    %267 = vmatmul.f32.gmra.mxu0 %v228
    %v268 = vpop.f32.mrf.mxu0
    %v269 = vadd.f32 %v201, %v268
    %270 = vmatmul.f32.gmra.mxu0 %v231
    %v271 = vpop.f32.mrf.mxu0
    %v272 = vadd.f32 %v206, %v271
    %273 = vdwg.mxu0
    %v274 = vmax.f32 %v251, 0.0
    %v275 = vmax.f32 %v254, 0.0
    %v276 = vmax.f32 %v257, 0.0
    %v277 = vmax.f32 %v260, 0.0
    %v278 = vmax.f32 %v263, 0.0
    %v279 = vmax.f32 %v266, 0.0
    %v280 = vmax.f32 %v269, 0.0
    %v281 = vmax.f32 %v272, 0.0
    %v282 = vld [vmem:[%s5] sm:$0xff]
    %v283 = vld [vmem:[%s5 + $0x8] sm:$0xff]
    %v284 = vld [vmem:[%s5 + $0x10] sm:$0xff]
    %v285 = vld [vmem:[%s5 + $0x18] sm:$0xff]
    %v286 = vld [vmem:[%s5 + $0x20] sm:$0xff]
    %v287 = vld [vmem:[%s5 + $0x28] sm:$0xff]
    %v288 = vld [vmem:[%s5 + $0x30] sm:$0xff]
    %v289 = vld [vmem:[%s5 + $0x38] sm:$0xff]
    %291 = vset.pattern.permute.xlu0 0
    %292 = vperm.xlu0 %291, %v282
    %v293 = vpop.permute.xlu0 %292
    %296 = vset.pattern.permute.xlu0 0
    %297 = vperm.xlu0 %296, %v283
    %v298 = vpop.permute.xlu0 %297
    %301 = vset.pattern.permute.xlu0 0
    %302 = vperm.xlu0 %301, %v284
    %v303 = vpop.permute.xlu0 %302
    %306 = vset.pattern.permute.xlu0 0
    %307 = vperm.xlu0 %306, %v285
    %v308 = vpop.permute.xlu0 %307
    %311 = vset.pattern.permute.xlu0 0
    %312 = vperm.xlu0 %311, %v286
    %v313 = vpop.permute.xlu0 %312
    %316 = vset.pattern.permute.xlu0 0
    %317 = vperm.xlu0 %316, %v287
    %v318 = vpop.permute.xlu0 %317
    %321 = vset.pattern.permute.xlu0 0
    %322 = vperm.xlu0 %321, %v288
    %v323 = vpop.permute.xlu0 %322
    %326 = vset.pattern.permute.xlu0 0
    %327 = vperm.xlu0 %326, %v289
    %v328 = vpop.permute.xlu0 %327
    %v330 = vmul.f32 %v293, %v274
    %v331 = vmul.f32 %v298, %v275
    %v332 = vmul.f32 %v303, %v276
    %v333 = vmul.f32 %v308, %v277
    %v334 = vmul.f32 %v313, %v278
    %v335 = vmul.f32 %v318, %v279
    %v336 = vmul.f32 %v323, %v280
    %v337 = vmul.f32 %v328, %v281
    %v338 = vadd.f32 %v330, %v331
    %v339 = vadd.f32 %v338, %v332
    %v340 = vadd.f32 %v339, %v333
    %v341 = vadd.f32 %v340, %v334
    %v342 = vadd.f32 %v341, %v335
    %v343 = vadd.f32 %v342, %v336
    %v344 = vadd.f32 %v343, %v337
    %v345 = vrot.slane %v344, 4
    %v346 = vadd.f32 %v344, %v345
    %v347 = vrot.slane %v346, 2
    %v348 = vadd.f32 %v346, %v347
    %v349 = vrot.slane %v348, 1
    %v350 = vadd.f32 %v348, %v349
    %s351 = sld [smem:[#allocation2]]
    %v352 = vstv %s351
    %v353 = vadd.f32 %v350, %v352
    %354 = vst [vmem:[#allocation3] sm:$0x1] %v353
    // Predicated region
    $region30: #{tpu_custom_call.1} parent=1 // pred_check
      _
    $region31: #{tpu_custom_call.1} parent=1 // pred_check_branch
      %356 = sbr.rel (0) target = $region33
    $region32: #{tpu_custom_call.1} parent=1 // pred_region
      %358 = vsyncadd [#allocation4], 0
      %s360 = sshll.u32 [#allocation3], 4
      %s361 = int_to_ptr.vmem [resolvable:$true] %s360
      %s362 = sshll.u32 %s7, 4
      %s363 = int_to_ptr.hbm [resolvable:$true] %s362
      %365 = dma.vmem_to_hbm [thread:$0]  %s361, 16, %s363, [#allocation4]
    $region33: #{tpu_custom_call.1} parent=1 // pred_fallthru
      _
    // Predicated region
    $region34: #{tpu_custom_call.1} parent=1 // pred_check
      _
    $region35: #{tpu_custom_call.1} parent=1 // pred_check_branch
      %367 = sbr.rel (0) target = $region37
    $region36: #{tpu_custom_call.1} parent=1 // pred_region
      %369 = dma.done [#allocation4], 16
    $region37: #{tpu_custom_call.1} parent=1 // pred_fallthru
      _
    %370 = vsyncpa [#allocation4], 1

</llo_original>
